<compile_context>
chip_gen: v6e
topology: v6e:2x2x1
jax: 0.10.0
libtpu: 0.0.40
codegen_flags: <defaults>
</compile_context>

<pallas_src>
import functools

import jax
import jax.numpy as jnp
from jax import lax
from jax.experimental import pallas as pl
from jax.experimental.pallas import tpu as pltpu


def residual_block_kernel(x_ref, w1_ref, b1_ref, w2_ref, b2_ref, alpha_ref,
                          o_ref, pad_ref, col_ref, *, H, W, K, Spad):
    """Fused conv->PReLU->conv->PReLU + skip for one block of images.

    Per grid step:
      x_ref, o_ref : (bt, C, H*W)           activations (lane dim = H*W)
      w*_ref       : (C, K*K*Cp)            im2col weights, Cin padded to Cp
      b*_ref       : (C, 1)                 conv biases (broadcast along lanes)
      alpha_ref    : (2,)  in SMEM          PReLU slopes [a1, a2]
      pad_ref      : (bt, Cp, Spad+HW+Spad) VMEM scratch, flat per-image halo
      col_ref      : (K*K*Cp, bt*HW)        VMEM scratch, im2col column matrix
    """
    bt, C, HW = x_ref.shape
    Cp = pad_ref.shape[1]
    p = K // 2
    S = p * W + p                       # largest |flat shift| over all taps

    # Zero the regions the tap reads touch but the convs never write: the two
    # halo strips and (if C < Cp) the padded channel rows of the interior.
    # Re-done every step (cheap) so each TensorCore's private scratch is valid
    # even when the "parallel" batch axis is split across v7x's two cores.
    pad_ref[:, :, Spad - S:Spad] = jnp.zeros((bt, Cp, S), jnp.float32)
    pad_ref[:, :, Spad + HW:Spad + HW + S] = jnp.zeros((bt, Cp, S), jnp.float32)
    if Cp > C:
        pad_ref[:, C:Cp, Spad:Spad + HW] = jnp.zeros((bt, Cp - C, HW),
                                                     jnp.float32)

    # Per-kw column-validity masks for the horizontal 'same' border (the
    # vertical border is handled by the zero halo strips).  Shared by both
    # convs and every image in the block; the center column needs no mask.
    xi = lax.broadcasted_iota(jnp.int32, (1, 1, HW), 2) % W
    col_masks = [None] * K
    for kw in range(K):
        if kw != p:
            dx = kw - p
            col_masks[kw] = jnp.logical_and(xi + dx >= 0, xi + dx < W)

    # Hoist parameter loads; scalars live in SMEM.
    w1 = w1_ref[...]
    w2 = w2_ref[...]
    b1 = b1_ref[...]
    b2 = b2_ref[...]
    a1 = alpha_ref[0]
    a2 = alpha_ref[1]

    def build_cols():
        """Halo interior -> im2col column matrix for the whole batch block."""
        for kh in range(K):
            for kw in range(K):
                t = kh * K + kw
                s = (kh - p) * W + (kw - p)              # flat shift of tap
                tap = pad_ref[:, :, Spad + s:Spad + s + HW]   # (bt, Cp, HW)
                if kw != p:
                    tap = jnp.where(col_masks[kw], tap, 0.0)
                tap = tap.astype(col_ref.dtype)
                for i in range(bt):
                    # Full-tile aligned store: rows t*Cp (mult of sublane),
                    # lanes i*HW (mult of 128 when HW is).
                    col_ref[t * Cp:(t + 1) * Cp, i * HW:(i + 1) * HW] = tap[i]

    def conv(w2d, bias):
        """'Same'-padded KxK conv of the whole block as ONE MXU matmul."""
        build_cols()
        acc = jnp.dot(w2d, col_ref[...], preferred_element_type=jnp.float32)
        return acc + bias                                # (C, bt*HW) f32

    def prelu(v, a):
        return jnp.where(v >= 0, v, v * a)

    # ---- conv1: interior <- x (whole block, 128-aligned lane offset) ----
    pad_ref[:, 0:C, Spad:Spad + HW] = x_ref[...]
    h = prelu(conv(w1, b1), a1)                          # (C, bt*HW)

    # ---- conv2: interior <- h (per-image lane slabs, all aligned) ----
    for i in range(bt):
        pad_ref[i, 0:C, Spad:Spad + HW] = h[:, i * HW:(i + 1) * HW]
    h = prelu(conv(w2, b2), a2)                          # (C, bt*HW)

    # ---- skip connection: lane-dense full-slab output stores ----
    for i in range(bt):
        o_ref[i] = x_ref[i] + h[:, i * HW:(i + 1) * HW]


def _vmem_capacity_bytes():
    try:
        info = pltpu.get_tpu_info()
        return int(getattr(info, "vmem_capacity_bytes", 64 * 1024 * 1024))
    except Exception:
        return 64 * 1024 * 1024


def residual_block_nchw(x, w1, b1, a1, w2, b2, a2, *, kernel_size,
                        batch_block=None, mxu_dtype=jnp.float32):
    """PyTorch-convention ResidualBlock forward.

    x: (B, C, H, W) f32; w1/w2: (C, C, K, K) OIHW; b1/b2: (C,);
    a1/a2: scalar PReLU slopes (nn.PReLU() single shared parameter).
    mxu_dtype: dtype of the MXU operands (weights + im2col columns).  f32 by
      default for exact-tolerance parity; jnp.bfloat16 roughly halves col_ref
      bandwidth and uses the native MXU path (re-validate tolerances).
    """
    B, C, H, W = x.shape
    K = kernel_size
    p = K // 2
    HW = H * W
    S = p * W + p

    mxu_dtype = jnp.dtype(mxu_dtype)
    sublane = 8 * (4 // mxu_dtype.itemsize)          # 8 for f32, 16 for bf16
    Cp = ((C + sublane - 1) // sublane) * sublane    # padded tap row group
    Spad = max(((S + 127) // 128) * 128, 128)        # lane-aligned leading halo
    HWpad = Spad + HW + Spad

    vmem_bytes = _vmem_capacity_bytes()

    # Batch block: as many images per grid step as the VMEM budget allows
    # (bigger blocks amortize the ~0.35us per-step overhead on v5e/v6e's
    # 128 MiB), but capped so the grid has >= 2 steps for v7x's two TCs.
    if batch_block is None:
        per_img = (2 * 2 * C * HW * 4                       # x/o double-buffered
                   + Cp * HWpad * 4                         # halo slab
                   + K * K * Cp * HW * mxu_dtype.itemsize)  # im2col columns
        budget = max(vmem_bytes // 4, 4 * 1024 * 1024)
        cap = min(max(1, budget // max(per_img, 1)), 8)
        if B >= 2:
            cap = min(cap, B // 2)                          # grid >= 2
        batch_block = 1
        for d in range(1, B + 1):
            if B % d == 0 and d <= cap:
                batch_block = d
    bt = batch_block
    assert B % bt == 0
    grid = (B // bt,)

    # Free reshape of activations; tiny one-time parameter reshapes.
    x_flat = x.reshape(B, C, HW).astype(jnp.float32)

    def pack_w(w):
        # OIHW -> (Cout, kh, kw, Cin), pad Cin -> Cp with zero columns so the
        # padded col_ref rows contribute nothing, then flatten tap-major.
        wt = jnp.transpose(w, (0, 2, 3, 1)).astype(jnp.float32)
        wt = jnp.pad(wt, ((0, 0), (0, 0), (0, 0), (0, Cp - C)))
        return wt.reshape(C, K * K * Cp).astype(mxu_dtype)

    w1m, w2m = pack_w(w1), pack_w(w2)
    b1c = b1.reshape(C, 1).astype(jnp.float32)
    b2c = b2.reshape(C, 1).astype(jnp.float32)
    alphas = jnp.stack([jnp.asarray(a1, jnp.float32).reshape(()),
                        jnp.asarray(a2, jnp.float32).reshape(())])

    vmem_limit = int(min(max(vmem_bytes * 3 // 4, 32 * 1024 * 1024),
                         96 * 1024 * 1024))

    # TODO(synk): for very large C*H*W, tile col_ref over a spatial grid axis
    # (or switch to per-tap accumulating matmuls) so it fits v7x's 64 MiB VMEM.
    out = pl.pallas_call(
        functools.partial(residual_block_kernel, H=H, W=W, K=K, Spad=Spad),
        out_shape=jax.ShapeDtypeStruct((B, C, HW), jnp.float32),
        grid=grid,
        in_specs=[
            pl.BlockSpec((bt, C, HW), lambda b: (b, 0, 0)),        # activations
            pl.BlockSpec((C, K * K * Cp), lambda b: (0, 0)),       # w1 (im2col)
            pl.BlockSpec((C, 1), lambda b: (0, 0)),                # b1
            pl.BlockSpec((C, K * K * Cp), lambda b: (0, 0)),       # w2 (im2col)
            pl.BlockSpec((C, 1), lambda b: (0, 0)),                # b2
            pl.BlockSpec(memory_space=pltpu.MemorySpace.SMEM),     # [a1, a2]
        ],
        out_specs=pl.BlockSpec((bt, C, HW), lambda b: (b, 0, 0)),
        scratch_shapes=[
            pltpu.VMEM((bt, Cp, HWpad), jnp.float32),              # flat halo
            pltpu.VMEM((K * K * Cp, bt * HW), mxu_dtype),          # im2col cols
        ],
        compiler_params=pltpu.CompilerParams(
            dimension_semantics=("parallel",),
            vmem_limit_bytes=vmem_limit),
    )(x_flat, w1m, b1c, w2m, b2c, alphas)
    return out.reshape(B, C, H, W)


def _reference_nchw(x, w1, b1, a1, w2, b2, a2):
    dn = ('NCHW', 'OIHW', 'NCHW')
    prelu = lambda v, a: jnp.where(v >= 0, v, a * v)
    conv = lambda v, w: lax.conv_general_dilated(
        v, w, (1, 1), 'SAME', dimension_numbers=dn,
        precision=lax.Precision.HIGHEST)
    C = x.shape[1]
    h = prelu(conv(x, w1) + b1.reshape(1, C, 1, 1), a1)
    h = prelu(conv(h, w2) + b2.reshape(1, C, 1, 1), a2)
    return x + h


if __name__ == "__main__":
    B, C, H, W = 2, 4, 16, 16
    K = 3

    key = jax.random.PRNGKey(0)
    k_x, k_w1, k_b1, k_w2, k_b2 = jax.random.split(key, 5)

    x = jax.random.normal(k_x, (B, C, H, W), jnp.float32)

    # Conv2d weights in PyTorch OIHW layout; nn.PReLU() init = 0.25.
    w1 = jax.random.normal(k_w1, (C, C, K, K), jnp.float32) * 0.1
    b1 = jax.random.normal(k_b1, (C,), jnp.float32) * 0.1
    w2 = jax.random.normal(k_w2, (C, C, K, K), jnp.float32) * 0.1
    b2 = jax.random.normal(k_b2, (C,), jnp.float32) * 0.1
    a1 = jnp.array(0.25, jnp.float32)
    a2 = jnp.array(0.25, jnp.float32)

    fn = jax.jit(functools.partial(residual_block_nchw, kernel_size=K))
    out = jax.block_until_ready(fn(x, w1, b1, a1, w2, b2, a2))

    ref = _reference_nchw(x, w1, b1, a1, w2, b2, a2)
    assert out.shape == (B, C, H, W)
    max_err = float(jnp.max(jnp.abs(out - ref)))
    assert jnp.allclose(out, ref, atol=1e-4, rtol=1e-4), (
        f"mismatch vs reference, max abs err = {max_err}")

    print("KERNEL_OK")
</pallas_src>

<mosaic_0001>
module attributes {stable_mosaic.version = 11 : i64} {
  func.func @residual_block_kernel(%arg0: i32, %arg1: memref<1x4x256xf32, #tpu.memory_space<vmem>>, %arg2: memref<4x72xf32, #tpu.memory_space<vmem>>, %arg3: memref<4x1xf32, #tpu.memory_space<vmem>>, %arg4: memref<4x72xf32, #tpu.memory_space<vmem>>, %arg5: memref<4x1xf32, #tpu.memory_space<vmem>>, %arg6: memref<2xf32, #tpu.memory_space<smem>>, %arg7: memref<1x4x256xf32, #tpu.memory_space<vmem>>, %arg8: memref<1x8x512xf32, #tpu.memory_space<vmem>>, %arg9: memref<72x256xf32, #tpu.memory_space<vmem>>) attributes {dimension_semantics = [#tpu.dimension_semantics<parallel>], iteration_bounds = array<i64: 2>, scalar_prefetch = 0 : i64, scratch_operands = 2 : i64, tpu.core_type = #tpu.core_type<tc>, window_params = [{transform_indices = @transform_0, window_bounds = array<i64: 1, 4, 256>}, {pipeline_mode = #tpu.pipeline_mode<synchronous>, transform_indices = @transform_1, window_bounds = array<i64: 4, 72>}, {pipeline_mode = #tpu.pipeline_mode<synchronous>, transform_indices = @transform_2, window_bounds = array<i64: 4, 1>}, {pipeline_mode = #tpu.pipeline_mode<synchronous>, transform_indices = @transform_3, window_bounds = array<i64: 4, 72>}, {pipeline_mode = #tpu.pipeline_mode<synchronous>, transform_indices = @transform_4, window_bounds = array<i64: 4, 1>}, {transform_indices = @transform_5, window_bounds = array<i64: 2>}, {transform_indices = @transform_6, window_bounds = array<i64: 1, 4, 256>}]} {
    %cst = arith.constant 0.000000e+00 : f32
    %0 = vector.broadcast %cst : f32 to vector<1x8x17xf32>
    %c0 = arith.constant 0 : index
    %c0_0 = arith.constant 0 : index
    %c111 = arith.constant 111 : index
    %1 = vector.load %arg8[%c0, %c0_0, %c111] : memref<1x8x512xf32, #tpu.memory_space<vmem>>, vector<1x8x17xf32>
    tpu.vector_store %arg8[%c0, %c0_0, %c111], %0 {strides = array<i32>} : memref<1x8x512xf32, #tpu.memory_space<vmem>>, vector<1x8x17xf32>,
    %cst_1 = arith.constant 0.000000e+00 : f32
    %2 = vector.broadcast %cst_1 : f32 to vector<1x8x17xf32>
    %c0_2 = arith.constant 0 : index
    %c0_3 = arith.constant 0 : index
    %c384 = arith.constant 384 : index
    %3 = vector.load %arg8[%c0_2, %c0_3, %c384] : memref<1x8x512xf32, #tpu.memory_space<vmem>>, vector<1x8x17xf32>
    tpu.vector_store %arg8[%c0_2, %c0_3, %c384], %2 {strides = array<i32>} : memref<1x8x512xf32, #tpu.memory_space<vmem>>, vector<1x8x17xf32>,
    %cst_4 = arith.constant 0.000000e+00 : f32
    %4 = vector.broadcast %cst_4 : f32 to vector<1x4x256xf32>
    %c0_5 = arith.constant 0 : index
    %c4 = arith.constant 4 : index
    %c128 = arith.constant 128 : index
    %5 = vector.load %arg8[%c0_5, %c4, %c128] : memref<1x8x512xf32, #tpu.memory_space<vmem>>, vector<1x4x256xf32>
    tpu.vector_store %arg8[%c0_5, %c4, %c128], %4 {strides = array<i32>} : memref<1x8x512xf32, #tpu.memory_space<vmem>>, vector<1x4x256xf32>,
    %6 = tpu.iota {dimensions = array<i32: 2>} : vector<1x1x256xi32>
    %c16_i32 = arith.constant 16 : i32
    %c0_i32 = arith.constant 0 : i32
    %7 = arith.cmpi eq, %c16_i32, %c0_i32 : i32
    %c1_i32 = arith.constant 1 : i32
    %8 = arith.select %7, %c1_i32, %c16_i32 : i32
    %9 = vector.broadcast %8 : i32 to vector<1x1x256xi32>
    %10 = arith.remsi %6, %9 : vector<1x1x256xi32>
    %c0_i32_6 = arith.constant 0 : i32
    %11 = vector.broadcast %c0_i32_6 : i32 to vector<1x1x256xi32>
    %12 = arith.cmpi ne, %10, %11 : vector<1x1x256xi32>
    %c0_i32_7 = arith.constant 0 : i32
    %13 = vector.broadcast %c0_i32_7 : i32 to vector<1x1x256xi32>
    %14 = arith.cmpi slt, %10, %13 : vector<1x1x256xi32>
    %c0_i32_8 = arith.constant 0 : i32
    %15 = arith.cmpi slt, %8, %c0_i32_8 : i32
    %16 = vector.broadcast %15 : i1 to vector<1x1x256xi1>
    %17 = vector.broadcast %16 : vector<1x1x256xi1> to vector<1x1x256xi1>
    %18 = arith.xori %14, %17 : vector<1x1x256xi1>
    %19 = arith.andi %18, %12 : vector<1x1x256xi1>
    %20 = vector.broadcast %8 : i32 to vector<1x1x256xi32>
    %21 = arith.addi %10, %20 : vector<1x1x256xi32>
    %22 = arith.select %19, %21, %10 : vector<1x1x256xi1>, vector<1x1x256xi32>
    %c-1_i32 = arith.constant -1 : i32
    %23 = vector.broadcast %c-1_i32 : i32 to vector<1x1x256xi32>
    %24 = arith.addi %22, %23 : vector<1x1x256xi32>
    %c0_i32_9 = arith.constant 0 : i32
    %25 = vector.broadcast %c0_i32_9 : i32 to vector<1x1x256xi32>
    %26 = arith.cmpi sge, %24, %25 : vector<1x1x256xi32>
    %c-1_i32_10 = arith.constant -1 : i32
    %27 = vector.broadcast %c-1_i32_10 : i32 to vector<1x1x256xi32>
    %28 = arith.addi %22, %27 : vector<1x1x256xi32>
    %c16_i32_11 = arith.constant 16 : i32
    %29 = vector.broadcast %c16_i32_11 : i32 to vector<1x1x256xi32>
    %30 = arith.cmpi slt, %28, %29 : vector<1x1x256xi32>
    %31 = arith.andi %26, %30 : vector<1x1x256xi1>
    %c1_i32_12 = arith.constant 1 : i32
    %32 = vector.broadcast %c1_i32_12 : i32 to vector<1x1x256xi32>
    %33 = arith.addi %22, %32 : vector<1x1x256xi32>
    %c0_i32_13 = arith.constant 0 : i32
    %34 = vector.broadcast %c0_i32_13 : i32 to vector<1x1x256xi32>
    %35 = arith.cmpi sge, %33, %34 : vector<1x1x256xi32>
    %c1_i32_14 = arith.constant 1 : i32
    %36 = vector.broadcast %c1_i32_14 : i32 to vector<1x1x256xi32>
    %37 = arith.addi %22, %36 : vector<1x1x256xi32>
    %c16_i32_15 = arith.constant 16 : i32
    %38 = vector.broadcast %c16_i32_15 : i32 to vector<1x1x256xi32>
    %39 = arith.cmpi slt, %37, %38 : vector<1x1x256xi32>
    %40 = arith.andi %35, %39 : vector<1x1x256xi1>
    %c0_16 = arith.constant 0 : index
    %c0_17 = arith.constant 0 : index
    %41 = vector.load %arg2[%c0_16, %c0_17] : memref<4x72xf32, #tpu.memory_space<vmem>>, vector<4x72xf32>
    %c0_18 = arith.constant 0 : index
    %c0_19 = arith.constant 0 : index
    %42 = vector.load %arg4[%c0_18, %c0_19] : memref<4x72xf32, #tpu.memory_space<vmem>>, vector<4x72xf32>
    %c0_20 = arith.constant 0 : index
    %c0_21 = arith.constant 0 : index
    %43 = vector.load %arg3[%c0_20, %c0_21] : memref<4x1xf32, #tpu.memory_space<vmem>>, vector<4x1xf32>
    %c0_22 = arith.constant 0 : index
    %c0_23 = arith.constant 0 : index
    %44 = vector.load %arg5[%c0_22, %c0_23] : memref<4x1xf32, #tpu.memory_space<vmem>>, vector<4x1xf32>
    %c0_24 = arith.constant 0 : index
    %45 = memref.load %arg6[%c0_24] : memref<2xf32, #tpu.memory_space<smem>>
    %c1 = arith.constant 1 : index
    %46 = memref.load %arg6[%c1] : memref<2xf32, #tpu.memory_space<smem>>
    %c0_25 = arith.constant 0 : index
    %c0_26 = arith.constant 0 : index
    %c0_27 = arith.constant 0 : index
    %47 = vector.load %arg1[%c0_25, %c0_26, %c0_27] : memref<1x4x256xf32, #tpu.memory_space<vmem>>, vector<1x4x256xf32>
    %c0_28 = arith.constant 0 : index
    %c0_29 = arith.constant 0 : index
    %c128_30 = arith.constant 128 : index
    %48 = vector.load %arg8[%c0_28, %c0_29, %c128_30] : memref<1x8x512xf32, #tpu.memory_space<vmem>>, vector<1x4x256xf32>
    tpu.vector_store %arg8[%c0_28, %c0_29, %c128_30], %47 {strides = array<i32>} : memref<1x8x512xf32, #tpu.memory_space<vmem>>, vector<1x4x256xf32>,
    %c0_31 = arith.constant 0 : index
    %c0_32 = arith.constant 0 : index
    %c111_33 = arith.constant 111 : index
    %49 = vector.load %arg8[%c0_31, %c0_32, %c111_33] : memref<1x8x512xf32, #tpu.memory_space<vmem>>, vector<1x8x256xf32>
    %cst_34 = arith.constant 0.000000e+00 : f32
    %50 = vector.shape_cast %31 : vector<1x1x256xi1> to vector<1x1x256xi1>
    %51 = vector.broadcast %50 : vector<1x1x256xi1> to vector<1x8x256xi1>
    %52 = vector.broadcast %cst_34 : f32 to vector<1x8x256xf32>
    %53 = arith.select %51, %49, %52 : vector<1x8x256xi1>, vector<1x8x256xf32>
    %54 = vector.shape_cast %53 : vector<1x8x256xf32> to vector<8x256xf32>
    %c0_35 = arith.constant 0 : index
    %c0_36 = arith.constant 0 : index
    %55 = vector.load %arg9[%c0_35, %c0_36] : memref<72x256xf32, #tpu.memory_space<vmem>>, vector<8x256xf32>
    tpu.vector_store %arg9[%c0_35, %c0_36], %54 {strides = array<i32>} : memref<72x256xf32, #tpu.memory_space<vmem>>, vector<8x256xf32>,
    %c0_37 = arith.constant 0 : index
    %c0_38 = arith.constant 0 : index
    %c112 = arith.constant 112 : index
    %56 = vector.load %arg8[%c0_37, %c0_38, %c112] : memref<1x8x512xf32, #tpu.memory_space<vmem>>, vector<1x8x256xf32>
    %57 = vector.shape_cast %56 : vector<1x8x256xf32> to vector<8x256xf32>
    %c8 = arith.constant 8 : index
    %c0_39 = arith.constant 0 : index
    %58 = vector.load %arg9[%c8, %c0_39] : memref<72x256xf32, #tpu.memory_space<vmem>>, vector<8x256xf32>
    tpu.vector_store %arg9[%c8, %c0_39], %57 {strides = array<i32>} : memref<72x256xf32, #tpu.memory_space<vmem>>, vector<8x256xf32>,
    %c0_40 = arith.constant 0 : index
    %c0_41 = arith.constant 0 : index
    %c113 = arith.constant 113 : index
    %59 = vector.load %arg8[%c0_40, %c0_41, %c113] : memref<1x8x512xf32, #tpu.memory_space<vmem>>, vector<1x8x256xf32>
    %cst_42 = arith.constant 0.000000e+00 : f32
    %60 = vector.shape_cast %40 : vector<1x1x256xi1> to vector<1x1x256xi1>
    %61 = vector.broadcast %60 : vector<1x1x256xi1> to vector<1x8x256xi1>
    %62 = vector.broadcast %cst_42 : f32 to vector<1x8x256xf32>
    %63 = arith.select %61, %59, %62 : vector<1x8x256xi1>, vector<1x8x256xf32>
    %64 = vector.shape_cast %63 : vector<1x8x256xf32> to vector<8x256xf32>
    %c16 = arith.constant 16 : index
    %c0_43 = arith.constant 0 : index
    %65 = vector.load %arg9[%c16, %c0_43] : memref<72x256xf32, #tpu.memory_space<vmem>>, vector<8x256xf32>
    tpu.vector_store %arg9[%c16, %c0_43], %64 {strides = array<i32>} : memref<72x256xf32, #tpu.memory_space<vmem>>, vector<8x256xf32>,
    %c0_44 = arith.constant 0 : index
    %c0_45 = arith.constant 0 : index
    %c127 = arith.constant 127 : index
    %66 = vector.load %arg8[%c0_44, %c0_45, %c127] : memref<1x8x512xf32, #tpu.memory_space<vmem>>, vector<1x8x256xf32>
    %cst_46 = arith.constant 0.000000e+00 : f32
    %67 = vector.shape_cast %31 : vector<1x1x256xi1> to vector<1x1x256xi1>
    %68 = vector.broadcast %67 : vector<1x1x256xi1> to vector<1x8x256xi1>
    %69 = vector.broadcast %cst_46 : f32 to vector<1x8x256xf32>
    %70 = arith.select %68, %66, %69 : vector<1x8x256xi1>, vector<1x8x256xf32>
    %71 = vector.shape_cast %70 : vector<1x8x256xf32> to vector<8x256xf32>
    %c24 = arith.constant 24 : index
    %c0_47 = arith.constant 0 : index
    %72 = vector.load %arg9[%c24, %c0_47] : memref<72x256xf32, #tpu.memory_space<vmem>>, vector<8x256xf32>
    tpu.vector_store %arg9[%c24, %c0_47], %71 {strides = array<i32>} : memref<72x256xf32, #tpu.memory_space<vmem>>, vector<8x256xf32>,
    %c0_48 = arith.constant 0 : index
    %c0_49 = arith.constant 0 : index
    %c128_50 = arith.constant 128 : index
    %73 = vector.load %arg8[%c0_48, %c0_49, %c128_50] : memref<1x8x512xf32, #tpu.memory_space<vmem>>, vector<1x8x256xf32>
    %74 = vector.shape_cast %73 : vector<1x8x256xf32> to vector<8x256xf32>
    %c32 = arith.constant 32 : index
    %c0_51 = arith.constant 0 : index
    %75 = vector.load %arg9[%c32, %c0_51] : memref<72x256xf32, #tpu.memory_space<vmem>>, vector<8x256xf32>
    tpu.vector_store %arg9[%c32, %c0_51], %74 {strides = array<i32>} : memref<72x256xf32, #tpu.memory_space<vmem>>, vector<8x256xf32>,
    %c0_52 = arith.constant 0 : index
    %c0_53 = arith.constant 0 : index
    %c129 = arith.constant 129 : index
    %76 = vector.load %arg8[%c0_52, %c0_53, %c129] : memref<1x8x512xf32, #tpu.memory_space<vmem>>, vector<1x8x256xf32>
    %cst_54 = arith.constant 0.000000e+00 : f32
    %77 = vector.shape_cast %40 : vector<1x1x256xi1> to vector<1x1x256xi1>
    %78 = vector.broadcast %77 : vector<1x1x256xi1> to vector<1x8x256xi1>
    %79 = vector.broadcast %cst_54 : f32 to vector<1x8x256xf32>
    %80 = arith.select %78, %76, %79 : vector<1x8x256xi1>, vector<1x8x256xf32>
    %81 = vector.shape_cast %80 : vector<1x8x256xf32> to vector<8x256xf32>
    %c40 = arith.constant 40 : index
    %c0_55 = arith.constant 0 : index
    %82 = vector.load %arg9[%c40, %c0_55] : memref<72x256xf32, #tpu.memory_space<vmem>>, vector<8x256xf32>
    tpu.vector_store %arg9[%c40, %c0_55], %81 {strides = array<i32>} : memref<72x256xf32, #tpu.memory_space<vmem>>, vector<8x256xf32>,
    %c0_56 = arith.constant 0 : index
    %c0_57 = arith.constant 0 : index
    %c143 = arith.constant 143 : index
    %83 = vector.load %arg8[%c0_56, %c0_57, %c143] : memref<1x8x512xf32, #tpu.memory_space<vmem>>, vector<1x8x256xf32>
    %cst_58 = arith.constant 0.000000e+00 : f32
    %84 = vector.shape_cast %31 : vector<1x1x256xi1> to vector<1x1x256xi1>
    %85 = vector.broadcast %84 : vector<1x1x256xi1> to vector<1x8x256xi1>
    %86 = vector.broadcast %cst_58 : f32 to vector<1x8x256xf32>
    %87 = arith.select %85, %83, %86 : vector<1x8x256xi1>, vector<1x8x256xf32>
    %88 = vector.shape_cast %87 : vector<1x8x256xf32> to vector<8x256xf32>
    %c48 = arith.constant 48 : index
    %c0_59 = arith.constant 0 : index
    %89 = vector.load %arg9[%c48, %c0_59] : memref<72x256xf32, #tpu.memory_space<vmem>>, vector<8x256xf32>
    tpu.vector_store %arg9[%c48, %c0_59], %88 {strides = array<i32>} : memref<72x256xf32, #tpu.memory_space<vmem>>, vector<8x256xf32>,
    %c0_60 = arith.constant 0 : index
    %c0_61 = arith.constant 0 : index
    %c144 = arith.constant 144 : index
    %90 = vector.load %arg8[%c0_60, %c0_61, %c144] : memref<1x8x512xf32, #tpu.memory_space<vmem>>, vector<1x8x256xf32>
    %91 = vector.shape_cast %90 : vector<1x8x256xf32> to vector<8x256xf32>
    %c56 = arith.constant 56 : index
    %c0_62 = arith.constant 0 : index
    %92 = vector.load %arg9[%c56, %c0_62] : memref<72x256xf32, #tpu.memory_space<vmem>>, vector<8x256xf32>
    tpu.vector_store %arg9[%c56, %c0_62], %91 {strides = array<i32>} : memref<72x256xf32, #tpu.memory_space<vmem>>, vector<8x256xf32>,
    %c0_63 = arith.constant 0 : index
    %c0_64 = arith.constant 0 : index
    %c145 = arith.constant 145 : index
    %93 = vector.load %arg8[%c0_63, %c0_64, %c145] : memref<1x8x512xf32, #tpu.memory_space<vmem>>, vector<1x8x256xf32>
    %cst_65 = arith.constant 0.000000e+00 : f32
    %94 = vector.shape_cast %40 : vector<1x1x256xi1> to vector<1x1x256xi1>
    %95 = vector.broadcast %94 : vector<1x1x256xi1> to vector<1x8x256xi1>
    %96 = vector.broadcast %cst_65 : f32 to vector<1x8x256xf32>
    %97 = arith.select %95, %93, %96 : vector<1x8x256xi1>, vector<1x8x256xf32>
    %98 = vector.shape_cast %97 : vector<1x8x256xf32> to vector<8x256xf32>
    %c64 = arith.constant 64 : index
    %c0_66 = arith.constant 0 : index
    %99 = vector.load %arg9[%c64, %c0_66] : memref<72x256xf32, #tpu.memory_space<vmem>>, vector<8x256xf32>
    tpu.vector_store %arg9[%c64, %c0_66], %98 {strides = array<i32>} : memref<72x256xf32, #tpu.memory_space<vmem>>, vector<8x256xf32>,
    %c0_67 = arith.constant 0 : index
    %c0_68 = arith.constant 0 : index
    %100 = vector.load %arg9[%c0_67, %c0_68] : memref<72x256xf32, #tpu.memory_space<vmem>>, vector<72x256xf32>
    %cst_69 = arith.constant dense<0.000000e+00> : vector<4x256xf32>
    %101 = tpu.matmul %41, %100, %cst_69 {dimension_numbers = #tpu.dot_dimension_numbers<[1], [0], [0], [1], [0, 0, 1, 1], [], []>} : vector<4x72xf32>, vector<72x256xf32>, vector<4x256xf32> -> vector<4x256xf32>
    %102 = vector.broadcast %43 : vector<4x1xf32> to vector<4x256xf32>
    %103 = arith.addf %101, %102 : vector<4x256xf32>
    %cst_70 = arith.constant 0.000000e+00 : f32
    %104 = vector.broadcast %cst_70 : f32 to vector<4x256xf32>
    %105 = arith.cmpf oge, %103, %104 : vector<4x256xf32>
    %106 = vector.broadcast %45 : f32 to vector<4x256xf32>
    %107 = arith.mulf %103, %106 : vector<4x256xf32>
    %108 = arith.select %105, %103, %107 : vector<4x256xi1>, vector<4x256xf32>
    %c0_71 = arith.constant 0 : index
    %c0_72 = arith.constant 0 : index
    %c128_73 = arith.constant 128 : index
    %109 = vector.load %arg8[%c0_71, %c0_72, %c128_73] : memref<1x8x512xf32, #tpu.memory_space<vmem>>, vector<1x4x256xf32>
    %110 = vector.shape_cast %109 : vector<1x4x256xf32> to vector<4x256xf32>
    %111 = vector.shape_cast %108 : vector<4x256xf32> to vector<1x4x256xf32>
    tpu.vector_store %arg8[%c0_71, %c0_72, %c128_73], %111 {strides = array<i32>} : memref<1x8x512xf32, #tpu.memory_space<vmem>>, vector<1x4x256xf32>,
    %c0_74 = arith.constant 0 : index
    %c0_75 = arith.constant 0 : index
    %c111_76 = arith.constant 111 : index
    %112 = vector.load %arg8[%c0_74, %c0_75, %c111_76] : memref<1x8x512xf32, #tpu.memory_space<vmem>>, vector<1x8x256xf32>
    %cst_77 = arith.constant 0.000000e+00 : f32
    %113 = vector.shape_cast %31 : vector<1x1x256xi1> to vector<1x1x256xi1>
    %114 = vector.broadcast %113 : vector<1x1x256xi1> to vector<1x8x256xi1>
    %115 = vector.broadcast %cst_77 : f32 to vector<1x8x256xf32>
    %116 = arith.select %114, %112, %115 : vector<1x8x256xi1>, vector<1x8x256xf32>
    %117 = vector.shape_cast %116 : vector<1x8x256xf32> to vector<8x256xf32>
    %c0_78 = arith.constant 0 : index
    %c0_79 = arith.constant 0 : index
    %118 = vector.load %arg9[%c0_78, %c0_79] : memref<72x256xf32, #tpu.memory_space<vmem>>, vector<8x256xf32>
    tpu.vector_store %arg9[%c0_78, %c0_79], %117 {strides = array<i32>} : memref<72x256xf32, #tpu.memory_space<vmem>>, vector<8x256xf32>,
    %c0_80 = arith.constant 0 : index
    %c0_81 = arith.constant 0 : index
    %c112_82 = arith.constant 112 : index
    %119 = vector.load %arg8[%c0_80, %c0_81, %c112_82] : memref<1x8x512xf32, #tpu.memory_space<vmem>>, vector<1x8x256xf32>
    %120 = vector.shape_cast %119 : vector<1x8x256xf32> to vector<8x256xf32>
    %c8_83 = arith.constant 8 : index
    %c0_84 = arith.constant 0 : index
    %121 = vector.load %arg9[%c8_83, %c0_84] : memref<72x256xf32, #tpu.memory_space<vmem>>, vector<8x256xf32>
    tpu.vector_store %arg9[%c8_83, %c0_84], %120 {strides = array<i32>} : memref<72x256xf32, #tpu.memory_space<vmem>>, vector<8x256xf32>,
    %c0_85 = arith.constant 0 : index
    %c0_86 = arith.constant 0 : index
    %c113_87 = arith.constant 113 : index
    %122 = vector.load %arg8[%c0_85, %c0_86, %c113_87] : memref<1x8x512xf32, #tpu.memory_space<vmem>>, vector<1x8x256xf32>
    %cst_88 = arith.constant 0.000000e+00 : f32
    %123 = vector.shape_cast %40 : vector<1x1x256xi1> to vector<1x1x256xi1>
    %124 = vector.broadcast %123 : vector<1x1x256xi1> to vector<1x8x256xi1>
    %125 = vector.broadcast %cst_88 : f32 to vector<1x8x256xf32>
    %126 = arith.select %124, %122, %125 : vector<1x8x256xi1>, vector<1x8x256xf32>
    %127 = vector.shape_cast %126 : vector<1x8x256xf32> to vector<8x256xf32>
    %c16_89 = arith.constant 16 : index
    %c0_90 = arith.constant 0 : index
    %128 = vector.load %arg9[%c16_89, %c0_90] : memref<72x256xf32, #tpu.memory_space<vmem>>, vector<8x256xf32>
    tpu.vector_store %arg9[%c16_89, %c0_90], %127 {strides = array<i32>} : memref<72x256xf32, #tpu.memory_space<vmem>>, vector<8x256xf32>,
    %c0_91 = arith.constant 0 : index
    %c0_92 = arith.constant 0 : index
    %c127_93 = arith.constant 127 : index
    %129 = vector.load %arg8[%c0_91, %c0_92, %c127_93] : memref<1x8x512xf32, #tpu.memory_space<vmem>>, vector<1x8x256xf32>
    %cst_94 = arith.constant 0.000000e+00 : f32
    %130 = vector.shape_cast %31 : vector<1x1x256xi1> to vector<1x1x256xi1>
    %131 = vector.broadcast %130 : vector<1x1x256xi1> to vector<1x8x256xi1>
    %132 = vector.broadcast %cst_94 : f32 to vector<1x8x256xf32>
    %133 = arith.select %131, %129, %132 : vector<1x8x256xi1>, vector<1x8x256xf32>
    %134 = vector.shape_cast %133 : vector<1x8x256xf32> to vector<8x256xf32>
    %c24_95 = arith.constant 24 : index
    %c0_96 = arith.constant 0 : index
    %135 = vector.load %arg9[%c24_95, %c0_96] : memref<72x256xf32, #tpu.memory_space<vmem>>, vector<8x256xf32>
    tpu.vector_store %arg9[%c24_95, %c0_96], %134 {strides = array<i32>} : memref<72x256xf32, #tpu.memory_space<vmem>>, vector<8x256xf32>,
    %c0_97 = arith.constant 0 : index
    %c0_98 = arith.constant 0 : index
    %c128_99 = arith.constant 128 : index
    %136 = vector.load %arg8[%c0_97, %c0_98, %c128_99] : memref<1x8x512xf32, #tpu.memory_space<vmem>>, vector<1x8x256xf32>
    %137 = vector.shape_cast %136 : vector<1x8x256xf32> to vector<8x256xf32>
    %c32_100 = arith.constant 32 : index
    %c0_101 = arith.constant 0 : index
    %138 = vector.load %arg9[%c32_100, %c0_101] : memref<72x256xf32, #tpu.memory_space<vmem>>, vector<8x256xf32>
    tpu.vector_store %arg9[%c32_100, %c0_101], %137 {strides = array<i32>} : memref<72x256xf32, #tpu.memory_space<vmem>>, vector<8x256xf32>,
    %c0_102 = arith.constant 0 : index
    %c0_103 = arith.constant 0 : index
    %c129_104 = arith.constant 129 : index
    %139 = vector.load %arg8[%c0_102, %c0_103, %c129_104] : memref<1x8x512xf32, #tpu.memory_space<vmem>>, vector<1x8x256xf32>
    %cst_105 = arith.constant 0.000000e+00 : f32
    %140 = vector.shape_cast %40 : vector<1x1x256xi1> to vector<1x1x256xi1>
    %141 = vector.broadcast %140 : vector<1x1x256xi1> to vector<1x8x256xi1>
    %142 = vector.broadcast %cst_105 : f32 to vector<1x8x256xf32>
    %143 = arith.select %141, %139, %142 : vector<1x8x256xi1>, vector<1x8x256xf32>
    %144 = vector.shape_cast %143 : vector<1x8x256xf32> to vector<8x256xf32>
    %c40_106 = arith.constant 40 : index
    %c0_107 = arith.constant 0 : index
    %145 = vector.load %arg9[%c40_106, %c0_107] : memref<72x256xf32, #tpu.memory_space<vmem>>, vector<8x256xf32>
    tpu.vector_store %arg9[%c40_106, %c0_107], %144 {strides = array<i32>} : memref<72x256xf32, #tpu.memory_space<vmem>>, vector<8x256xf32>,
    %c0_108 = arith.constant 0 : index
    %c0_109 = arith.constant 0 : index
    %c143_110 = arith.constant 143 : index
    %146 = vector.load %arg8[%c0_108, %c0_109, %c143_110] : memref<1x8x512xf32, #tpu.memory_space<vmem>>, vector<1x8x256xf32>
    %cst_111 = arith.constant 0.000000e+00 : f32
    %147 = vector.shape_cast %31 : vector<1x1x256xi1> to vector<1x1x256xi1>
    %148 = vector.broadcast %147 : vector<1x1x256xi1> to vector<1x8x256xi1>
    %149 = vector.broadcast %cst_111 : f32 to vector<1x8x256xf32>
    %150 = arith.select %148, %146, %149 : vector<1x8x256xi1>, vector<1x8x256xf32>
    %151 = vector.shape_cast %150 : vector<1x8x256xf32> to vector<8x256xf32>
    %c48_112 = arith.constant 48 : index
    %c0_113 = arith.constant 0 : index
    %152 = vector.load %arg9[%c48_112, %c0_113] : memref<72x256xf32, #tpu.memory_space<vmem>>, vector<8x256xf32>
    tpu.vector_store %arg9[%c48_112, %c0_113], %151 {strides = array<i32>} : memref<72x256xf32, #tpu.memory_space<vmem>>, vector<8x256xf32>,
    %c0_114 = arith.constant 0 : index
    %c0_115 = arith.constant 0 : index
    %c144_116 = arith.constant 144 : index
    %153 = vector.load %arg8[%c0_114, %c0_115, %c144_116] : memref<1x8x512xf32, #tpu.memory_space<vmem>>, vector<1x8x256xf32>
    %154 = vector.shape_cast %153 : vector<1x8x256xf32> to vector<8x256xf32>
    %c56_117 = arith.constant 56 : index
    %c0_118 = arith.constant 0 : index
    %155 = vector.load %arg9[%c56_117, %c0_118] : memref<72x256xf32, #tpu.memory_space<vmem>>, vector<8x256xf32>
    tpu.vector_store %arg9[%c56_117, %c0_118], %154 {strides = array<i32>} : memref<72x256xf32, #tpu.memory_space<vmem>>, vector<8x256xf32>,
    %c0_119 = arith.constant 0 : index
    %c0_120 = arith.constant 0 : index
    %c145_121 = arith.constant 145 : index
    %156 = vector.load %arg8[%c0_119, %c0_120, %c145_121] : memref<1x8x512xf32, #tpu.memory_space<vmem>>, vector<1x8x256xf32>
    %cst_122 = arith.constant 0.000000e+00 : f32
    %157 = vector.shape_cast %40 : vector<1x1x256xi1> to vector<1x1x256xi1>
    %158 = vector.broadcast %157 : vector<1x1x256xi1> to vector<1x8x256xi1>
    %159 = vector.broadcast %cst_122 : f32 to vector<1x8x256xf32>
    %160 = arith.select %158, %156, %159 : vector<1x8x256xi1>, vector<1x8x256xf32>
    %161 = vector.shape_cast %160 : vector<1x8x256xf32> to vector<8x256xf32>
    %c64_123 = arith.constant 64 : index
    %c0_124 = arith.constant 0 : index
    %162 = vector.load %arg9[%c64_123, %c0_124] : memref<72x256xf32, #tpu.memory_space<vmem>>, vector<8x256xf32>
    tpu.vector_store %arg9[%c64_123, %c0_124], %161 {strides = array<i32>} : memref<72x256xf32, #tpu.memory_space<vmem>>, vector<8x256xf32>,
    %c0_125 = arith.constant 0 : index
    %c0_126 = arith.constant 0 : index
    %163 = vector.load %arg9[%c0_125, %c0_126] : memref<72x256xf32, #tpu.memory_space<vmem>>, vector<72x256xf32>
    %cst_127 = arith.constant dense<0.000000e+00> : vector<4x256xf32>
    %164 = tpu.matmul %42, %163, %cst_127 {dimension_numbers = #tpu.dot_dimension_numbers<[1], [0], [0], [1], [0, 0, 1, 1], [], []>} : vector<4x72xf32>, vector<72x256xf32>, vector<4x256xf32> -> vector<4x256xf32>
    %165 = vector.broadcast %44 : vector<4x1xf32> to vector<4x256xf32>
    %166 = arith.addf %164, %165 : vector<4x256xf32>
    %cst_128 = arith.constant 0.000000e+00 : f32
    %167 = vector.broadcast %cst_128 : f32 to vector<4x256xf32>
    %168 = arith.cmpf oge, %166, %167 : vector<4x256xf32>
    %169 = vector.broadcast %46 : f32 to vector<4x256xf32>
    %170 = arith.mulf %166, %169 : vector<4x256xf32>
    %171 = arith.select %168, %166, %170 : vector<4x256xi1>, vector<4x256xf32>
    %c0_129 = arith.constant 0 : index
    %c0_130 = arith.constant 0 : index
    %c0_131 = arith.constant 0 : index
    %172 = vector.load %arg1[%c0_129, %c0_130, %c0_131] : memref<1x4x256xf32, #tpu.memory_space<vmem>>, vector<1x4x256xf32>
    %173 = vector.shape_cast %172 : vector<1x4x256xf32> to vector<4x256xf32>
    %174 = arith.addf %173, %171 : vector<4x256xf32>
    %c0_132 = arith.constant 0 : index
    %c0_133 = arith.constant 0 : index
    %c0_134 = arith.constant 0 : index
    %175 = vector.load %arg7[%c0_132, %c0_133, %c0_134] : memref<1x4x256xf32, #tpu.memory_space<vmem>>, vector<1x4x256xf32>
    %176 = vector.shape_cast %175 : vector<1x4x256xf32> to vector<4x256xf32>
    %177 = vector.shape_cast %174 : vector<4x256xf32> to vector<1x4x256xf32>
    tpu.vector_store %arg7[%c0_132, %c0_133, %c0_134], %177 {strides = array<i32>} : memref<1x4x256xf32, #tpu.memory_space<vmem>>, vector<1x4x256xf32>,
    return
  }
  func.func @transform_0(%arg0: i32) -> (i32, i32, i32) {
    %c0_i32 = arith.constant 0 : i32
    %c0_i32_0 = arith.constant 0 : i32
    %c0_i32_1 = arith.constant 0 : i32
    return %arg0, %c0_i32, %c0_i32_0 : i32, i32, i32
  }
  func.func @transform_1(%arg0: i32) -> (i32, i32) {
    %c0_i32 = arith.constant 0 : i32
    %c0_i32_0 = arith.constant 0 : i32
    %c0_i32_1 = arith.constant 0 : i32
    return %c0_i32, %c0_i32_0 : i32, i32
  }
  func.func @transform_2(%arg0: i32) -> (i32, i32) {
    %c0_i32 = arith.constant 0 : i32
    %c0_i32_0 = arith.constant 0 : i32
    %c0_i32_1 = arith.constant 0 : i32
    return %c0_i32, %c0_i32_0 : i32, i32
  }
  func.func @transform_3(%arg0: i32) -> (i32, i32) {
    %c0_i32 = arith.constant 0 : i32
    %c0_i32_0 = arith.constant 0 : i32
    %c0_i32_1 = arith.constant 0 : i32
    return %c0_i32, %c0_i32_0 : i32, i32
  }
  func.func @transform_4(%arg0: i32) -> (i32, i32) {
    %c0_i32 = arith.constant 0 : i32
    %c0_i32_0 = arith.constant 0 : i32
    %c0_i32_1 = arith.constant 0 : i32
    return %c0_i32, %c0_i32_0 : i32, i32
  }
  func.func @transform_5(%arg0: i32) -> i32 {
    %c0_i32 = arith.constant 0 : i32
    %c0_i32_0 = arith.constant 0 : i32
    return %c0_i32 : i32
  }
  func.func @transform_6(%arg0: i32) -> (i32, i32, i32) {
    %c0_i32 = arith.constant 0 : i32
    %c0_i32_0 = arith.constant 0 : i32
    %c0_i32_1 = arith.constant 0 : i32
    return %arg0, %c0_i32, %c0_i32_0 : i32, i32, i32
  }
}

</mosaic_0001>

<llo_original>
// kernel: residual_block_nchw.1
$region0: #{residual_block_nchw.1}
  #allocation0 [shape = 'u32[]', space=smem, size = 0x4, offset = 0x4, fixed_abs, tag = 'smem constant byte address 0x4 - core index']
  #allocation1 [shape = 'u32[144,128]{1,0:T(1,128)}', space=vmem, size = 0x12000, scoped, tag = 'internal scratch']
  #allocation2 [shape = 'f32[1,8,512]{2,1,0:T(8,128)}', space=vmem, size = 0x4000, scoped, tag = 'scratch operand']
  #allocation3 [shape = 'f32[72,256]{1,0:T(8,128)}', space=vmem, size = 0x12000, scoped, tag = 'scratch operand']
  %s0 = inlined_call_operand.vmem [shape: f32[2,4,256], index: 0, kind: input, shape index: {}]
  %s1 = inlined_call_operand.vmem [shape: f32[4,72], index: 1, kind: input, shape index: {}]
  %s2 = inlined_call_operand.vmem [shape: f32[4,1], index: 2, kind: input, shape index: {}]
  %s3 = inlined_call_operand.vmem [shape: f32[4,72], index: 3, kind: input, shape index: {}]
  %s4 = inlined_call_operand.vmem [shape: f32[4,1], index: 4, kind: input, shape index: {}]
  %s5 = inlined_call_operand.vmem [shape: f32[2], index: 5, kind: input, shape index: {}]
  %s6 = inlined_call_operand.vmem [shape: f32[2,4,256], index: 6, kind: output, shape index: {}]
  %s7 = sld [smem:[#allocation0]]
  $region61: #{residual_block_nchw.1} parent=0
    _
  %s9 = ssub.s32 1, %s7
  %s10 = scalar_select 0, %s9, %s7
  $region1: #{residual_block_nchw.1} parent=0
    #allocation4 [shape = 'u8[512]{0}', space=smem, size = 0x200, scoped, tag = 'input window, operand 5, single buffered']
    #allocation5 [shape = 's32[2]{0}', space=sflag, size = 0x8, scoped, tag = 'scoped memory for residual_block_nchw.1']
    %11 = vsyncpa [#allocation5], 0
    loop: start=0, step=1, limit=4
    $region2: #{residual_block_nchw.1} parent=1 // loop_pre_header
      _
    $region3: #{residual_block_nchw.1} parent=1 // loop_header
      %s13 = sphi 0, %s17
      %p14 = scmp.ge.s32.totalorder %s13, 4
      %s23 = sphi 0, %s25
      %s26 = sphi 0, %s23
      %s27 = sphi 0, %s26
      %s43 = sphi 0, %s27
      %s47 = sphi 0, %s47
      %s49 = sphi 0, %s47
      %s50 = sphi 0, %s49
      %s64 = sphi 0, %s50
      %s68 = sphi 0, %s68
      %s70 = sphi 0, %s68
      %s71 = sphi 0, %s70
      %s85 = sphi 0, %s71
      %s89 = sphi 0, %s89
      %s91 = sphi 0, %s89
      %s92 = sphi 0, %s91
      %s106 = sphi 0, %s92
      %s110 = sphi 0, %s110
      %s112 = sphi 0, %s110
      %s113 = sphi 0, %s112
      %s127 = sphi 0, %s113
      %s131 = sphi 0, %s131
      %s133 = sphi 0, %s131
      %s134 = sphi 0, %s133
      %s148 = sphi 0, %s134
      %s154 = sphi 0, %s156
      %s157 = sphi 0, %s154
      %s158 = sphi 0, %s157
      %s174 = sphi 0, %s158
    $region4: #{residual_block_nchw.1} parent=1 // loop_header_branch
      %16 = sbr.rel (%p14) target = $region8
    $region5: #{residual_block_nchw.1} parent=1 // loop_body
      %s18 = ssub.s32 %s13, 1
      %s19 = ssub.s32 %s13, 2
      %s20 = sadd.s32 %s13, 1
      %s21 = ssub.s32 %s13, %s20
      %p22 = scmp.eq.s32.totalorder %s21, 0
      %s24 = sadd.s32 %s23, 1
      %s25 = scalar_select %p22, %s23, %s24
      %p28 = pneg %p22
      %p29 = scmp.eq.s32.totalorder %s13, 1
      %p30 = por %p28, %p29
      %p31 = scmp.ne.s32.totalorder %s23, %s26
      %p32 = scmp.eq.s32.totalorder %s13, 0
      %p33 = por %p31, %p32
      %p34 = scmp.ne.s32.totalorder %s23, %s26
      %p35 = scmp.eq.s32.totalorder %s18, 1
      %p36 = por %p34, %p35
      %p37 = scmp.ne.s32.totalorder %s26, %s27
      %p38 = scmp.eq.s32.totalorder %s18, 0
      %p39 = por %p37, %p38
      %p40 = scmp.ne.s32.totalorder %s26, %s27
      %p41 = scmp.eq.s32.totalorder %s19, 1
      %p42 = por %p40, %p41
      %p44 = scmp.ne.s32.totalorder %s27, %s43
      %p45 = scmp.eq.s32.totalorder %s19, 0
      %p46 = por %p44, %p45
      %s48 = sadd.s32 %s47, 1
      %p51 = scmp.eq.s32.totalorder %s13, 1
      %p52 = scmp.ne.s32.totalorder %s47, %s49
      %p53 = scmp.eq.s32.totalorder %s13, 0
      %p54 = por %p52, %p53
      %p55 = scmp.ne.s32.totalorder %s47, %s49
      %p56 = scmp.eq.s32.totalorder %s18, 1
      %p57 = por %p55, %p56
      %p58 = scmp.ne.s32.totalorder %s49, %s50
      %p59 = scmp.eq.s32.totalorder %s18, 0
      %p60 = por %p58, %p59
      %p61 = scmp.ne.s32.totalorder %s49, %s50
      %p62 = scmp.eq.s32.totalorder %s19, 1
      %p63 = por %p61, %p62
      %p65 = scmp.ne.s32.totalorder %s50, %s64
      %p66 = scmp.eq.s32.totalorder %s19, 0
      %p67 = por %p65, %p66
      %s69 = sadd.s32 %s68, 1
      %p72 = scmp.eq.s32.totalorder %s13, 1
      %p73 = scmp.ne.s32.totalorder %s68, %s70
      %p74 = scmp.eq.s32.totalorder %s13, 0
      %p75 = por %p73, %p74
      %p76 = scmp.ne.s32.totalorder %s68, %s70
      %p77 = scmp.eq.s32.totalorder %s18, 1
      %p78 = por %p76, %p77
      %p79 = scmp.ne.s32.totalorder %s70, %s71
      %p80 = scmp.eq.s32.totalorder %s18, 0
      %p81 = por %p79, %p80
      %p82 = scmp.ne.s32.totalorder %s70, %s71
      %p83 = scmp.eq.s32.totalorder %s19, 1
      %p84 = por %p82, %p83
      %p86 = scmp.ne.s32.totalorder %s71, %s85
      %p87 = scmp.eq.s32.totalorder %s19, 0
      %p88 = por %p86, %p87
      %s90 = sadd.s32 %s89, 1
      %p93 = scmp.eq.s32.totalorder %s13, 1
      %p94 = scmp.ne.s32.totalorder %s89, %s91
      %p95 = scmp.eq.s32.totalorder %s13, 0
      %p96 = por %p94, %p95
      %p97 = scmp.ne.s32.totalorder %s89, %s91
      %p98 = scmp.eq.s32.totalorder %s18, 1
      %p99 = por %p97, %p98
      %p100 = scmp.ne.s32.totalorder %s91, %s92
      %p101 = scmp.eq.s32.totalorder %s18, 0
      %p102 = por %p100, %p101
      %p103 = scmp.ne.s32.totalorder %s91, %s92
      %p104 = scmp.eq.s32.totalorder %s19, 1
      %p105 = por %p103, %p104
      %p107 = scmp.ne.s32.totalorder %s92, %s106
      %p108 = scmp.eq.s32.totalorder %s19, 0
      %p109 = por %p107, %p108
      %s111 = sadd.s32 %s110, 1
      %p114 = scmp.eq.s32.totalorder %s13, 1
      %p115 = scmp.ne.s32.totalorder %s110, %s112
      %p116 = scmp.eq.s32.totalorder %s13, 0
      %p117 = por %p115, %p116
      %p118 = scmp.ne.s32.totalorder %s110, %s112
      %p119 = scmp.eq.s32.totalorder %s18, 1
      %p120 = por %p118, %p119
      %p121 = scmp.ne.s32.totalorder %s112, %s113
      %p122 = scmp.eq.s32.totalorder %s18, 0
      %p123 = por %p121, %p122
      %p124 = scmp.ne.s32.totalorder %s112, %s113
      %p125 = scmp.eq.s32.totalorder %s19, 1
      %p126 = por %p124, %p125
      %p128 = scmp.ne.s32.totalorder %s113, %s127
      %p129 = scmp.eq.s32.totalorder %s19, 0
      %p130 = por %p128, %p129
      %s132 = sadd.s32 %s131, 1
      %p135 = scmp.eq.s32.totalorder %s13, 1
      %p136 = scmp.ne.s32.totalorder %s131, %s133
      %p137 = scmp.eq.s32.totalorder %s13, 0
      %p138 = por %p136, %p137
      %p139 = scmp.ne.s32.totalorder %s131, %s133
      %p140 = scmp.eq.s32.totalorder %s18, 1
      %p141 = por %p139, %p140
      %p142 = scmp.ne.s32.totalorder %s133, %s134
      %p143 = scmp.eq.s32.totalorder %s18, 0
      %p144 = por %p142, %p143
      %p145 = scmp.ne.s32.totalorder %s133, %s134
      %p146 = scmp.eq.s32.totalorder %s19, 1
      %p147 = por %p145, %p146
      %p149 = scmp.ne.s32.totalorder %s134, %s148
      %p150 = scmp.eq.s32.totalorder %s19, 0
      %p151 = por %p149, %p150
      %s152 = ssub.s32 %s13, %s20
      %p153 = scmp.eq.s32.totalorder %s152, 0
      %s155 = sadd.s32 %s154, 1
      %s156 = scalar_select %p153, %s154, %s155
      %p159 = pneg %p153
      %p160 = scmp.eq.s32.totalorder %s13, 1
      %p161 = por %p159, %p160
      %p162 = scmp.ne.s32.totalorder %s154, %s157
      %p163 = scmp.eq.s32.totalorder %s13, 0
      %p164 = por %p162, %p163
      %p165 = scmp.ne.s32.totalorder %s154, %s157
      %p166 = scmp.eq.s32.totalorder %s18, 1
      %p167 = por %p165, %p166
      %p168 = scmp.ne.s32.totalorder %s157, %s158
      %p169 = scmp.eq.s32.totalorder %s18, 0
      %p170 = por %p168, %p169
      %p171 = scmp.ne.s32.totalorder %s157, %s158
      %p172 = scmp.eq.s32.totalorder %s19, 1
      %p173 = por %p171, %p172
      %p175 = scmp.ne.s32.totalorder %s158, %s174
      %p176 = scmp.eq.s32.totalorder %s19, 0
      %p177 = por %p175, %p176
      %p178 = scmp.le.s32.totalorder 1, %s13
      %p179 = scmp.lt.s32.totalorder %s13, 3
      %p180 = pnand %p178, %p179
      %p181 = pneg %p180
      // Predicated region
      $region9: #{residual_block_nchw.1} parent=5 // pred_check
        _
      $region10: #{residual_block_nchw.1} parent=5 // pred_check_branch
        %183 = sbr.rel (%p180) target = $region12
      $region11: #{residual_block_nchw.1} parent=5 // pred_region
        %s184 = ssub.s32 %s13, 1
        // Predicated region
        $region13: #{residual_block_nchw.1} parent=11 // pred_check
          %p185 = pneg %p60
        $region14: #{residual_block_nchw.1} parent=11 // pred_check_branch
          %187 = sbr.rel (%p185) target = $region16
        $region15: #{residual_block_nchw.1} parent=11 // pred_region
          _
        $region16: #{residual_block_nchw.1} parent=11 // pred_fallthru
          _
        // Predicated region
        $region17: #{residual_block_nchw.1} parent=11 // pred_check
          %p188 = pneg %p81
        $region18: #{residual_block_nchw.1} parent=11 // pred_check_branch
          %190 = sbr.rel (%p188) target = $region20
        $region19: #{residual_block_nchw.1} parent=11 // pred_region
          _
        $region20: #{residual_block_nchw.1} parent=11 // pred_fallthru
          _
        // Predicated region
        $region21: #{residual_block_nchw.1} parent=11 // pred_check
          %p191 = pneg %p102
        $region22: #{residual_block_nchw.1} parent=11 // pred_check_branch
          %193 = sbr.rel (%p191) target = $region24
        $region23: #{residual_block_nchw.1} parent=11 // pred_region
          _
        $region24: #{residual_block_nchw.1} parent=11 // pred_fallthru
          _
        // Predicated region
        $region25: #{residual_block_nchw.1} parent=11 // pred_check
          %p194 = pneg %p123
        $region26: #{residual_block_nchw.1} parent=11 // pred_check_branch
          %196 = sbr.rel (%p194) target = $region28
        $region27: #{residual_block_nchw.1} parent=11 // pred_region
          _
        $region28: #{residual_block_nchw.1} parent=11 // pred_fallthru
          _
        // Predicated region
        $region29: #{residual_block_nchw.1} parent=11 // pred_check
          %p197 = pneg %p144
        $region30: #{residual_block_nchw.1} parent=11 // pred_check_branch
          %199 = sbr.rel (%p197) target = $region32
        $region31: #{residual_block_nchw.1} parent=11 // pred_region
          %s201 = ssub.s32 16, 16
          %202 = vsyncadd [#allocation5], %s201
          %s204 = sshll.u32 %s5, 4
          %s205 = int_to_ptr.vmem [resolvable:$true] %s204
          %207 = dma.vmem_to_smem %s205, 16, [#allocation4], [#allocation5]
        $region32: #{residual_block_nchw.1} parent=11 // pred_fallthru
          _
      $region12: #{residual_block_nchw.1} parent=5 // pred_fallthru
        _
      %p208 = scmp.lt.s32.totalorder %s13, 2
      // Predicated region
      $region33: #{residual_block_nchw.1} parent=5 // pred_check
        %p209 = pneg %p208
      $region34: #{residual_block_nchw.1} parent=5 // pred_check_branch
        %211 = sbr.rel (%p209) target = $region36
      $region35: #{residual_block_nchw.1} parent=5 // pred_region
        // Predicated region
        $region37: #{residual_block_nchw.1} parent=35 // pred_check
          %p212 = pneg %p33
        $region38: #{residual_block_nchw.1} parent=35 // pred_check_branch
          %214 = sbr.rel (%p212) target = $region40
        $region39: #{residual_block_nchw.1} parent=35 // pred_region
          %p215 = scmp.lt.s32.totalorder %s13, 1
          %s216 = scalar_select %p215, %s13, 1
          %s217 = smul.addr %s216, 2
          %s218 = smul.addr %s217, 4
          %s219 = scalar_lea.vmem %s0, %s218
        $region40: #{residual_block_nchw.1} parent=35 // pred_fallthru
          _
      $region36: #{residual_block_nchw.1} parent=5 // pred_fallthru
        _
      %p220 = scmp.le.s32.totalorder 1, %s13
      %p221 = scmp.lt.s32.totalorder %s13, 3
      %p222 = pnand %p220, %p221
      %p223 = pneg %p222
      // Predicated region
      $region41: #{residual_block_nchw.1} parent=5 // pred_check
        _
      $region42: #{residual_block_nchw.1} parent=5 // pred_check_branch
        %225 = sbr.rel (%p222) target = $region44
      $region43: #{residual_block_nchw.1} parent=5 // pred_region
        %s226 = ssub.s32 %s13, 1
        // Predicated region
        $region45: #{residual_block_nchw.1} parent=43 // pred_check
          %p227 = pneg %p144
        $region46: #{residual_block_nchw.1} parent=43 // pred_check_branch
          %229 = sbr.rel (%p227) target = $region48
        $region47: #{residual_block_nchw.1} parent=43 // pred_region
          %230 = dma.done [#allocation5], 16
        $region48: #{residual_block_nchw.1} parent=43 // pred_fallthru
          _
        %231 = sfence
        %p232 = scmp.lt.s32.totalorder %s18, 1
        %s233 = scalar_select %p232, %s18, 1
        %s234 = smul.addr %s233, 2
        %s235 = smul.addr %s234, 4
        %s236 = scalar_lea.vmem %s0, %s235
        %p237 = pneg %p39
        %p238 = pneg %p36
        %p239 = pneg %p60
        %p240 = pneg %p57
        %p241 = pneg %p81
        %p242 = pneg %p78
        %p243 = pneg %p102
        %p244 = pneg %p99
        %p245 = pneg %p123
        %p246 = pneg %p120
        %p247 = pneg %p144
        %p248 = pneg %p141
        %p249 = pneg %p170
        %p250 = pneg %p167
        %p251 = scmp.lt.s32.totalorder %s18, 1
        %s252 = scalar_select %p251, %s18, 1
        %s253 = smul.addr %s252, 2
        %s254 = smul.addr %s253, 4
        %s255 = scalar_lea.vmem %s6, %s254
        %p256 = scmp.lt.s32.totalorder %s18, 1
        %s257 = scalar_select %p256, %s18, 1
        %s258 = smul.addr %s257, 2
        %s259 = smul.addr %s258, 4
        %s260 = scalar_lea.vmem %s0, %s259
        %p261 = scmp.lt.s32.totalorder %s18, 1
        %s262 = scalar_select %p261, %s18, 1
        %s263 = smul.addr %s262, 2
        %s264 = smul.addr %s263, 4
        %s265 = scalar_lea.vmem %s6, %s264
        %vm266 = vcmask 1048440
        %267 = vst.msk [vmem:[#allocation2] sm:$0xff] %vm266, 0.0
        %vm268 = vcmask 138240
        %269 = vst.msk [vmem:[#allocation2 + $0x18] sm:$0xff] %vm268, 0.0
        %270 = vst [vmem:[#allocation2 + $0x8] sm:$0xf0] 0.0
        %271 = vst [vmem:[#allocation2 + $0x10] sm:$0xf0] 0.0
        %v272 = vlaneseq
        %v273 = vand.u32 %v272, 127
        %v274 = vadd.s32 %v273, 128
        %vm275 = vcmp.lt.s32.totalorder %v273, 0
        %v276 = vsub.s32 0, %v273
        %v277 = vsel %vm275, %v276, %v273
        %v278 = vshrl.u32 %v277, 4
        %v279 = vand.u32 %v277, 15
        %v280 = vsub.s32 0, %v279
        %v281 = vsel %vm275, %v280, %v279
        %vm282 = vcmp.lt.s32.totalorder %v274, 0
        %v283 = vsub.s32 0, %v274
        %v284 = vsel %vm282, %v283, %v274
        %v285 = vshrl.u32 %v284, 4
        %v286 = vand.u32 %v284, 15
        %v287 = vsub.s32 0, %v286
        %v288 = vsel %vm282, %v287, %v286
        %vm289 = vcmp.ne.s32.totalorder %v281, 0
        %vm290 = vcmp.ne.s32.totalorder %v288, 0
        %vm291 = vcmp.lt.s32.totalorder %v281, 0
        %vm292 = vcmp.lt.s32.totalorder %v288, 0
        %vm293 = vmand %vm291, %vm289
        %vm294 = vmand %vm292, %vm290
        %v295 = vadd.s32 %v281, 16
        %v296 = vadd.s32 %v288, 16
        %v297 = vsel %vm293, %v295, %v281
        %v298 = vsel %vm294, %v296, %v288
        %v299 = vadd.s32 %v297, 4294967295
        %v300 = vadd.s32 %v298, 4294967295
        %vm301 = vcmp.ge.s32.totalorder %v299, 0
        %vm302 = vcmp.ge.s32.totalorder %v300, 0
        %vm303 = vcmp.lt.s32.totalorder %v299, 16
        %vm304 = vcmp.lt.s32.totalorder %v300, 16
        %vm305 = vmand %vm301, %vm303
        %vm306 = vmand %vm302, %vm304
        %v307 = vadd.s32 %v297, 1
        %v308 = vadd.s32 %v298, 1
        %vm309 = vcmp.ge.s32.totalorder %v307, 0
        %vm310 = vcmp.ge.s32.totalorder %v308, 0
        %vm311 = vcmp.lt.s32.totalorder %v307, 16
        %vm312 = vcmp.lt.s32.totalorder %v308, 16
        %vm313 = vmand %vm309, %vm311
        %vm314 = vmand %vm310, %vm312
        %v315 = vld [vmem:[%s1] sm:$0xf]
        %v316 = vld [vmem:[%s3] sm:$0xf]
        %v317 = vld [vmem:[%s2] sm:$0xf]
        %v318 = vld [vmem:[%s4] sm:$0xf]
        %s319 = sld [smem:[#allocation4]]
        %s320 = sld [smem:[#allocation4 + $0x1]]
        %v321 = vld [vmem:[%s260] sm:$0xff]
        %v323 = vcombine.high %v321, %v321
        %325 = vst [vmem:[#allocation2 + $0x8] sm:$0xf] %v321
        %326 = vst [vmem:[#allocation2 + $0x10] sm:$0xf] %v323
        %v327 = vld [vmem:[#allocation2] sm:$0xff]
        %v328 = vld [vmem:[#allocation2 + $0x8] sm:$0xff]
        %v329 = vld [vmem:[#allocation2 + $0x10] sm:$0xff]
        %v330 = vsel %vm305, 1, 0
        %v331 = vsel %vm306, 1, 0
        %vm332 = vcmp.eq.s32.totalorder %v330, 1
        %vm333 = vcmp.eq.s32.totalorder %v331, 1
        %337 = vrot.lane.b32.xlu0 %v327, 17
        %v338 = vpop.permute.xlu0 %337
        %339 = vrot.lane.b32.xlu0 %v328, 17
        %v340 = vpop.permute.xlu0 %339
        %341 = vrot.lane.b32.xlu0 %v329, 17
        %v342 = vpop.permute.xlu0 %341
        %v343 = vsel %vm268, %v338, %v340
        %v344 = vsel %vm268, %v340, %v342
        %v347 = vsel %vm332, %v343, 0.0
        %v348 = vsel %vm333, %v344, 0.0
        %349 = vst [vmem:[#allocation3] sm:$0xff] %v347
        %350 = vst [vmem:[#allocation3 + $0x8] sm:$0xff] %v348
        %v351 = vld [vmem:[#allocation2] sm:$0xff]
        %v352 = vld [vmem:[#allocation2 + $0x8] sm:$0xff]
        %v353 = vld [vmem:[#allocation2 + $0x10] sm:$0xff]
        %357 = vrot.lane.b32.xlu0 %v351, 16
        %v358 = vpop.permute.xlu0 %357
        %359 = vrot.lane.b32.xlu0 %v352, 16
        %v360 = vpop.permute.xlu0 %359
        %361 = vrot.lane.b32.xlu0 %v353, 16
        %v362 = vpop.permute.xlu0 %361
        %vm363 = vcmask 130048
        %v364 = vsel %vm363, %v358, %v360
        %v365 = vsel %vm363, %v360, %v362
        %368 = vst [vmem:[#allocation3 + $0x10] sm:$0xff] %v364
        %369 = vst [vmem:[#allocation3 + $0x18] sm:$0xff] %v365
        %v370 = vld [vmem:[#allocation2] sm:$0xff]
        %v371 = vld [vmem:[#allocation2 + $0x8] sm:$0xff]
        %v372 = vld [vmem:[#allocation2 + $0x10] sm:$0xff]
        %v373 = vsel %vm313, 1, 0
        %v374 = vsel %vm314, 1, 0
        %vm375 = vcmp.eq.s32.totalorder %v373, 1
        %vm376 = vcmp.eq.s32.totalorder %v374, 1
        %380 = vrot.lane.b32.xlu0 %v370, 15
        %v381 = vpop.permute.xlu0 %380
        %382 = vrot.lane.b32.xlu0 %v371, 15
        %v383 = vpop.permute.xlu0 %382
        %384 = vrot.lane.b32.xlu0 %v372, 15
        %v385 = vpop.permute.xlu0 %384
        %vm386 = vcmask 121856
        %v387 = vsel %vm386, %v381, %v383
        %v388 = vsel %vm386, %v383, %v385
        %v391 = vsel %vm375, %v387, 0.0
        %v392 = vsel %vm376, %v388, 0.0
        %393 = vst [vmem:[#allocation3 + $0x20] sm:$0xff] %v391
        %394 = vst [vmem:[#allocation3 + $0x28] sm:$0xff] %v392
        %v395 = vld [vmem:[#allocation2] sm:$0xff]
        %v396 = vld [vmem:[#allocation2 + $0x8] sm:$0xff]
        %v397 = vld [vmem:[#allocation2 + $0x10] sm:$0xff]
        %401 = vrot.lane.b32.xlu0 %v395, 1
        %v402 = vpop.permute.xlu0 %401
        %403 = vrot.lane.b32.xlu0 %v396, 1
        %v404 = vpop.permute.xlu0 %403
        %405 = vrot.lane.b32.xlu0 %v397, 1
        %v406 = vpop.permute.xlu0 %405
        %vm407 = vcmask 7168
        %v408 = vsel %vm407, %v402, %v404
        %v409 = vsel %vm407, %v404, %v406
        %v412 = vsel %vm332, %v408, 0.0
        %v413 = vsel %vm333, %v409, 0.0
        %414 = vst [vmem:[#allocation3 + $0x30] sm:$0xff] %v412
        %415 = vst [vmem:[#allocation3 + $0x38] sm:$0xff] %v413
        %v416 = vld [vmem:[#allocation2 + $0x8] sm:$0xff]
        %v417 = vld [vmem:[#allocation2 + $0x10] sm:$0xff]
        %418 = vst [vmem:[#allocation3 + $0x40] sm:$0xff] %v416
        %419 = vst [vmem:[#allocation3 + $0x48] sm:$0xff] %v417
        %v420 = vld [vmem:[#allocation2 + $0x8] sm:$0xff]
        %v421 = vld [vmem:[#allocation2 + $0x10] sm:$0xff]
        %v422 = vld [vmem:[#allocation2 + $0x18] sm:$0xff]
        %426 = vrot.lane.b32.xlu0 %v420, 127
        %v427 = vpop.permute.xlu0 %426
        %428 = vrot.lane.b32.xlu0 %v421, 127
        %v429 = vpop.permute.xlu0 %428
        %430 = vrot.lane.b32.xlu0 %v422, 127
        %v431 = vpop.permute.xlu0 %430
        %vm432 = vcmask 1039360
        %v433 = vsel %vm432, %v427, %v429
        %v434 = vsel %vm432, %v429, %v431
        %v437 = vsel %vm375, %v433, 0.0
        %v438 = vsel %vm376, %v434, 0.0
        %439 = vst [vmem:[#allocation3 + $0x50] sm:$0xff] %v437
        %440 = vst [vmem:[#allocation3 + $0x58] sm:$0xff] %v438
        %v441 = vld [vmem:[#allocation2 + $0x8] sm:$0xff]
        %v442 = vld [vmem:[#allocation2 + $0x10] sm:$0xff]
        %v443 = vld [vmem:[#allocation2 + $0x18] sm:$0xff]
        %447 = vrot.lane.b32.xlu0 %v441, 113
        %v448 = vpop.permute.xlu0 %447
        %449 = vrot.lane.b32.xlu0 %v442, 113
        %v450 = vpop.permute.xlu0 %449
        %451 = vrot.lane.b32.xlu0 %v443, 113
        %v452 = vpop.permute.xlu0 %451
        %vm453 = vcmask 924672
        %v454 = vsel %vm453, %v448, %v450
        %v455 = vsel %vm453, %v450, %v452
        %v458 = vsel %vm332, %v454, 0.0
        %v459 = vsel %vm333, %v455, 0.0
        %460 = vst [vmem:[#allocation3 + $0x60] sm:$0xff] %v458
        %461 = vst [vmem:[#allocation3 + $0x68] sm:$0xff] %v459
        %v462 = vld [vmem:[#allocation2 + $0x8] sm:$0xff]
        %v463 = vld [vmem:[#allocation2 + $0x10] sm:$0xff]
        %v464 = vld [vmem:[#allocation2 + $0x18] sm:$0xff]
        %468 = vrot.lane.b32.xlu0 %v462, 112
        %v469 = vpop.permute.xlu0 %468
        %470 = vrot.lane.b32.xlu0 %v463, 112
        %v471 = vpop.permute.xlu0 %470
        %472 = vrot.lane.b32.xlu0 %v464, 112
        %v473 = vpop.permute.xlu0 %472
        %vm474 = vcmask 916480
        %v475 = vsel %vm474, %v469, %v471
        %v476 = vsel %vm474, %v471, %v473
        %479 = vst [vmem:[#allocation3 + $0x70] sm:$0xff] %v475
        %480 = vst [vmem:[#allocation3 + $0x78] sm:$0xff] %v476
        %v481 = vld [vmem:[#allocation2 + $0x8] sm:$0xff]
        %v482 = vld [vmem:[#allocation2 + $0x10] sm:$0xff]
        %v483 = vld [vmem:[#allocation2 + $0x18] sm:$0xff]
        %487 = vrot.lane.b32.xlu0 %v481, 111
        %v488 = vpop.permute.xlu0 %487
        %489 = vrot.lane.b32.xlu0 %v482, 111
        %v490 = vpop.permute.xlu0 %489
        %491 = vrot.lane.b32.xlu0 %v483, 111
        %v492 = vpop.permute.xlu0 %491
        %vm493 = vcmask 908288
        %v494 = vsel %vm493, %v488, %v490
        %v495 = vsel %vm493, %v490, %v492
        %v498 = vsel %vm375, %v494, 0.0
        %v499 = vsel %vm376, %v495, 0.0
        %500 = vst [vmem:[#allocation3 + $0x80] sm:$0xff] %v498
        %501 = vst [vmem:[#allocation3 + $0x88] sm:$0xff] %v499
        %v502 = vld [vmem:[#allocation3] sm:$0xff]
        %v503 = vld [vmem:[#allocation3 + $0x8] sm:$0xff]
        %v504 = vld [vmem:[#allocation3 + $0x10] sm:$0xff]
        %v505 = vld [vmem:[#allocation3 + $0x18] sm:$0xff]
        %v506 = vld [vmem:[#allocation3 + $0x20] sm:$0xff]
        %v507 = vld [vmem:[#allocation3 + $0x28] sm:$0xff]
        %v508 = vld [vmem:[#allocation3 + $0x30] sm:$0xff]
        %v509 = vld [vmem:[#allocation3 + $0x38] sm:$0xff]
        %v510 = vld [vmem:[#allocation3 + $0x40] sm:$0xff]
        %v511 = vld [vmem:[#allocation3 + $0x48] sm:$0xff]
        %v512 = vld [vmem:[#allocation3 + $0x50] sm:$0xff]
        %v513 = vld [vmem:[#allocation3 + $0x58] sm:$0xff]
        %v514 = vld [vmem:[#allocation3 + $0x60] sm:$0xff]
        %v515 = vld [vmem:[#allocation3 + $0x68] sm:$0xff]
        %v516 = vld [vmem:[#allocation3 + $0x70] sm:$0xff]
        %v517 = vld [vmem:[#allocation3 + $0x78] sm:$0xff]
        %v518 = vld [vmem:[#allocation3 + $0x80] sm:$0xff]
        %v519 = vld [vmem:[#allocation3 + $0x88] sm:$0xff]
        %521 = vset.pattern.permute.xlu0 0
        %522 = vperm.xlu0 %521, %v317
        %v523 = vpop.permute.xlu0 %522
        %vm525 = vcmask 588800
        %v527 = vsel %vm525, %v315, 0
        %529 = vmatprep.subr.mxu0 0.0
        %530 = vmatpush1.msra.mxu0 0.0
        %531 = vmatprep.subr.mxu0 0.0
        %532 = vmatpush1.msra.mxu0 0.0
        %533 = vmatprep.subr.mxu0 0.0
        %534 = vmatpush1.msra.mxu0 0.0
        %535 = vmatprep.subr.mxu0 0.0
        %536 = vmatpush1.msra.mxu0 0.0
        %537 = vmatprep.subr.mxu0 0.0
        %538 = vmatpush1.msra.mxu0 0.0
        %539 = vmatprep.subr.mxu0 0.0
        %540 = vmatpush1.msra.mxu0 0.0
        %541 = vmatprep.subr.mxu0 0.0
        %542 = vmatpush1.msra.mxu0 0.0
        %543 = vmatprep.subr.mxu0 %v519
        %544 = vmatpush1.msra.mxu0 %v518
        %545 = vmatprep.subr.mxu0 %v517
        %546 = vmatpush1.msra.mxu0 %v516
        %547 = vmatprep.subr.mxu0 %v515
        %548 = vmatpush1.msra.mxu0 %v514
        %549 = vmatprep.subr.mxu0 %v513
        %550 = vmatpush1.msra.mxu0 %v512
        %551 = vmatprep.subr.mxu0 %v511
        %552 = vmatpush1.msra.mxu0 %v510
        %553 = vmatprep.subr.mxu0 %v509
        %554 = vmatpush1.msra.mxu0 %v508
        %555 = vmatprep.subr.mxu0 %v507
        %556 = vmatpush1.msra.mxu0 %v506
        %557 = vmatprep.subr.mxu0 %v505
        %558 = vmatpush1.msra.mxu0 %v504
        %559 = vmatprep.subr.mxu0 %v503
        %560 = vmatpush1.msra.mxu0 %v502
        %561 = vmatprep.subr.mxu0 0.0
        %562 = vmatpush2.msra.mxu0 0.0
        %563 = vmatprep.subr.mxu0 0.0
        %564 = vmatpush2.msra.mxu0 0.0
        %565 = vmatprep.subr.mxu0 0.0
        %566 = vmatpush2.msra.mxu0 0.0
        %567 = vmatprep.subr.mxu0 0.0
        %568 = vmatpush2.msra.mxu0 0.0
        %569 = vmatprep.subr.mxu0 0.0
        %570 = vmatpush2.msra.mxu0 0.0
        %571 = vmatprep.subr.mxu0 0.0
        %572 = vmatpush2.msra.mxu0 0.0
        %573 = vmatprep.subr.mxu0 0.0
        %574 = vmatpush2.msra.mxu0 0.0
        %575 = vmatprep.subr.mxu0 0.0
        %576 = vmatpush2.msra.mxu0 0.0
        %577 = vmatprep.subr.mxu0 0.0
        %578 = vmatpush2.msra.mxu0 0.0
        %579 = vmatprep.subr.mxu0 0.0
        %580 = vmatpush2.msra.mxu0 0.0
        %581 = vmatprep.subr.mxu0 0.0
        %582 = vmatpush2.msra.mxu0 0.0
        %583 = vmatprep.subr.mxu0 0.0
        %584 = vmatpush2.msra.mxu0 0.0
        %585 = vmatprep.subr.mxu0 0.0
        %586 = vmatpush2.msra.mxu0 0.0
        %587 = vmatprep.subr.mxu0 0.0
        %588 = vmatpush2.msra.mxu0 0.0
        %589 = vmatprep.subr.mxu0 0.0
        %590 = vmatpush2.msra.mxu0 0.0
        %591 = vmatprep.subr.mxu0 0.0
        %592 = vmatpush2.msra.mxu0 0.0
        %593 = vmatprep.mubr.f32.mxu0 0.0
        %594 = vmatmul.mubr.f32.gmra.mxu0 %v527
        %v595 = vpop.f32.mrf.mxu0
        %v596 = vadd.f32 %v523, %v595
        %v597 = vpop.f32.mrf.mxu0
        %v598 = vadd.f32 %v523, %v597
        %599 = vdwg.mxu0
        %vm600 = vcmp.ge.f32.partialorder %v596, 0.0
        %vm601 = vcmp.ge.f32.partialorder %v598, 0.0
        %v602 = vstv %s319
        %v603 = vmul.f32 %v596, %v602
        %v604 = vmul.f32 %v598, %v602
        %v605 = vsel %vm600, %v596, %v603
        %v606 = vsel %vm601, %v598, %v604
        %607 = vst [vmem:[#allocation2 + $0x8] sm:$0xf] %v605
        %608 = vst [vmem:[#allocation2 + $0x10] sm:$0xf] %v606
        %v609 = vld [vmem:[#allocation2] sm:$0xff]
        %v610 = vld [vmem:[#allocation2 + $0x8] sm:$0xff]
        %v611 = vld [vmem:[#allocation2 + $0x10] sm:$0xff]
        %615 = vrot.lane.b32.xlu0 %v609, 17
        %v616 = vpop.permute.xlu0 %615
        %617 = vrot.lane.b32.xlu0 %v610, 17
        %v618 = vpop.permute.xlu0 %617
        %619 = vrot.lane.b32.xlu0 %v611, 17
        %v620 = vpop.permute.xlu0 %619
        %v621 = vsel %vm268, %v616, %v618
        %v622 = vsel %vm268, %v618, %v620
        %v625 = vsel %vm332, %v621, 0.0
        %v626 = vsel %vm333, %v622, 0.0
        %627 = vst [vmem:[#allocation3] sm:$0xff] %v625
        %628 = vst [vmem:[#allocation3 + $0x8] sm:$0xff] %v626
        %v629 = vld [vmem:[#allocation2] sm:$0xff]
        %v630 = vld [vmem:[#allocation2 + $0x8] sm:$0xff]
        %v631 = vld [vmem:[#allocation2 + $0x10] sm:$0xff]
        %635 = vrot.lane.b32.xlu0 %v629, 16
        %v636 = vpop.permute.xlu0 %635
        %637 = vrot.lane.b32.xlu0 %v630, 16
        %v638 = vpop.permute.xlu0 %637
        %639 = vrot.lane.b32.xlu0 %v631, 16
        %v640 = vpop.permute.xlu0 %639
        %v641 = vsel %vm363, %v636, %v638
        %v642 = vsel %vm363, %v638, %v640
        %645 = vst [vmem:[#allocation3 + $0x10] sm:$0xff] %v641
        %646 = vst [vmem:[#allocation3 + $0x18] sm:$0xff] %v642
        %v647 = vld [vmem:[#allocation2] sm:$0xff]
        %v648 = vld [vmem:[#allocation2 + $0x8] sm:$0xff]
        %v649 = vld [vmem:[#allocation2 + $0x10] sm:$0xff]
        %653 = vrot.lane.b32.xlu0 %v647, 15
        %v654 = vpop.permute.xlu0 %653
        %655 = vrot.lane.b32.xlu0 %v648, 15
        %v656 = vpop.permute.xlu0 %655
        %657 = vrot.lane.b32.xlu0 %v649, 15
        %v658 = vpop.permute.xlu0 %657
        %v659 = vsel %vm386, %v654, %v656
        %v660 = vsel %vm386, %v656, %v658
        %v663 = vsel %vm375, %v659, 0.0
        %v664 = vsel %vm376, %v660, 0.0
        %665 = vst [vmem:[#allocation3 + $0x20] sm:$0xff] %v663
        %666 = vst [vmem:[#allocation3 + $0x28] sm:$0xff] %v664
        %v667 = vld [vmem:[#allocation2] sm:$0xff]
        %v668 = vld [vmem:[#allocation2 + $0x8] sm:$0xff]
        %v669 = vld [vmem:[#allocation2 + $0x10] sm:$0xff]
        %673 = vrot.lane.b32.xlu0 %v667, 1
        %v674 = vpop.permute.xlu0 %673
        %675 = vrot.lane.b32.xlu0 %v668, 1
        %v676 = vpop.permute.xlu0 %675
        %677 = vrot.lane.b32.xlu0 %v669, 1
        %v678 = vpop.permute.xlu0 %677
        %v679 = vsel %vm407, %v674, %v676
        %v680 = vsel %vm407, %v676, %v678
        %v683 = vsel %vm332, %v679, 0.0
        %v684 = vsel %vm333, %v680, 0.0
        %685 = vst [vmem:[#allocation3 + $0x30] sm:$0xff] %v683
        %686 = vst [vmem:[#allocation3 + $0x38] sm:$0xff] %v684
        %v687 = vld [vmem:[#allocation2 + $0x8] sm:$0xff]
        %v688 = vld [vmem:[#allocation2 + $0x10] sm:$0xff]
        %689 = vst [vmem:[#allocation3 + $0x40] sm:$0xff] %v687
        %690 = vst [vmem:[#allocation3 + $0x48] sm:$0xff] %v688
        %v691 = vld [vmem:[#allocation2 + $0x8] sm:$0xff]
        %v692 = vld [vmem:[#allocation2 + $0x10] sm:$0xff]
        %v693 = vld [vmem:[#allocation2 + $0x18] sm:$0xff]
        %697 = vrot.lane.b32.xlu0 %v691, 127
        %v698 = vpop.permute.xlu0 %697
        %699 = vrot.lane.b32.xlu0 %v692, 127
        %v700 = vpop.permute.xlu0 %699
        %701 = vrot.lane.b32.xlu0 %v693, 127
        %v702 = vpop.permute.xlu0 %701
        %v703 = vsel %vm432, %v698, %v700
        %v704 = vsel %vm432, %v700, %v702
        %v707 = vsel %vm375, %v703, 0.0
        %v708 = vsel %vm376, %v704, 0.0
        %709 = vst [vmem:[#allocation3 + $0x50] sm:$0xff] %v707
        %710 = vst [vmem:[#allocation3 + $0x58] sm:$0xff] %v708
        %v711 = vld [vmem:[#allocation2 + $0x8] sm:$0xff]
        %v712 = vld [vmem:[#allocation2 + $0x10] sm:$0xff]
        %v713 = vld [vmem:[#allocation2 + $0x18] sm:$0xff]
        %717 = vrot.lane.b32.xlu0 %v711, 113
        %v718 = vpop.permute.xlu0 %717
        %719 = vrot.lane.b32.xlu0 %v712, 113
        %v720 = vpop.permute.xlu0 %719
        %721 = vrot.lane.b32.xlu0 %v713, 113
        %v722 = vpop.permute.xlu0 %721
        %v723 = vsel %vm453, %v718, %v720
        %v724 = vsel %vm453, %v720, %v722
        %v727 = vsel %vm332, %v723, 0.0
        %v728 = vsel %vm333, %v724, 0.0
        %729 = vst [vmem:[#allocation3 + $0x60] sm:$0xff] %v727
        %730 = vst [vmem:[#allocation3 + $0x68] sm:$0xff] %v728
        %v731 = vld [vmem:[#allocation2 + $0x8] sm:$0xff]
        %v732 = vld [vmem:[#allocation2 + $0x10] sm:$0xff]
        %v733 = vld [vmem:[#allocation2 + $0x18] sm:$0xff]
        %737 = vrot.lane.b32.xlu0 %v731, 112
        %v738 = vpop.permute.xlu0 %737
        %739 = vrot.lane.b32.xlu0 %v732, 112
        %v740 = vpop.permute.xlu0 %739
        %741 = vrot.lane.b32.xlu0 %v733, 112
        %v742 = vpop.permute.xlu0 %741
        %v743 = vsel %vm474, %v738, %v740
        %v744 = vsel %vm474, %v740, %v742
        %747 = vst [vmem:[#allocation3 + $0x70] sm:$0xff] %v743
        %748 = vst [vmem:[#allocation3 + $0x78] sm:$0xff] %v744
        %v749 = vld [vmem:[#allocation2 + $0x8] sm:$0xff]
        %v750 = vld [vmem:[#allocation2 + $0x10] sm:$0xff]
        %v751 = vld [vmem:[#allocation2 + $0x18] sm:$0xff]
        %755 = vrot.lane.b32.xlu0 %v749, 111
        %v756 = vpop.permute.xlu0 %755
        %757 = vrot.lane.b32.xlu0 %v750, 111
        %v758 = vpop.permute.xlu0 %757
        %759 = vrot.lane.b32.xlu0 %v751, 111
        %v760 = vpop.permute.xlu0 %759
        %v761 = vsel %vm493, %v756, %v758
        %v762 = vsel %vm493, %v758, %v760
        %v765 = vsel %vm375, %v761, 0.0
        %v766 = vsel %vm376, %v762, 0.0
        %767 = vst [vmem:[#allocation3 + $0x80] sm:$0xff] %v765
        %768 = vst [vmem:[#allocation3 + $0x88] sm:$0xff] %v766
        %v769 = vld [vmem:[#allocation3] sm:$0xff]
        %v770 = vld [vmem:[#allocation3 + $0x8] sm:$0xff]
        %v771 = vld [vmem:[#allocation3 + $0x10] sm:$0xff]
        %v772 = vld [vmem:[#allocation3 + $0x18] sm:$0xff]
        %v773 = vld [vmem:[#allocation3 + $0x20] sm:$0xff]
        %v774 = vld [vmem:[#allocation3 + $0x28] sm:$0xff]
        %v775 = vld [vmem:[#allocation3 + $0x30] sm:$0xff]
        %v776 = vld [vmem:[#allocation3 + $0x38] sm:$0xff]
        %v777 = vld [vmem:[#allocation3 + $0x40] sm:$0xff]
        %v778 = vld [vmem:[#allocation3 + $0x48] sm:$0xff]
        %v779 = vld [vmem:[#allocation3 + $0x50] sm:$0xff]
        %v780 = vld [vmem:[#allocation3 + $0x58] sm:$0xff]
        %v781 = vld [vmem:[#allocation3 + $0x60] sm:$0xff]
        %v782 = vld [vmem:[#allocation3 + $0x68] sm:$0xff]
        %v783 = vld [vmem:[#allocation3 + $0x70] sm:$0xff]
        %v784 = vld [vmem:[#allocation3 + $0x78] sm:$0xff]
        %v785 = vld [vmem:[#allocation3 + $0x80] sm:$0xff]
        %v786 = vld [vmem:[#allocation3 + $0x88] sm:$0xff]
        %788 = vset.pattern.permute.xlu0 0
        %789 = vperm.xlu0 %788, %v318
        %v790 = vpop.permute.xlu0 %789
        %v793 = vsel %vm525, %v316, 0
        %795 = vmatprep.subr.mxu0 0.0
        %796 = vmatpush1.msra.mxu0 0.0
        %797 = vmatprep.subr.mxu0 0.0
        %798 = vmatpush1.msra.mxu0 0.0
        %799 = vmatprep.subr.mxu0 0.0
        %800 = vmatpush1.msra.mxu0 0.0
        %801 = vmatprep.subr.mxu0 0.0
        %802 = vmatpush1.msra.mxu0 0.0
        %803 = vmatprep.subr.mxu0 0.0
        %804 = vmatpush1.msra.mxu0 0.0
        %805 = vmatprep.subr.mxu0 0.0
        %806 = vmatpush1.msra.mxu0 0.0
        %807 = vmatprep.subr.mxu0 0.0
        %808 = vmatpush1.msra.mxu0 0.0
        %809 = vmatprep.subr.mxu0 %v786
        %810 = vmatpush1.msra.mxu0 %v785
        %811 = vmatprep.subr.mxu0 %v784
        %812 = vmatpush1.msra.mxu0 %v783
        %813 = vmatprep.subr.mxu0 %v782
        %814 = vmatpush1.msra.mxu0 %v781
        %815 = vmatprep.subr.mxu0 %v780
        %816 = vmatpush1.msra.mxu0 %v779
        %817 = vmatprep.subr.mxu0 %v778
        %818 = vmatpush1.msra.mxu0 %v777
        %819 = vmatprep.subr.mxu0 %v776
        %820 = vmatpush1.msra.mxu0 %v775
        %821 = vmatprep.subr.mxu0 %v774
        %822 = vmatpush1.msra.mxu0 %v773
        %823 = vmatprep.subr.mxu0 %v772
        %824 = vmatpush1.msra.mxu0 %v771
        %825 = vmatprep.subr.mxu0 %v770
        %826 = vmatpush1.msra.mxu0 %v769
        %827 = vmatprep.subr.mxu0 0.0
        %828 = vmatpush2.msra.mxu0 0.0
        %829 = vmatprep.subr.mxu0 0.0
        %830 = vmatpush2.msra.mxu0 0.0
        %831 = vmatprep.subr.mxu0 0.0
        %832 = vmatpush2.msra.mxu0 0.0
        %833 = vmatprep.subr.mxu0 0.0
        %834 = vmatpush2.msra.mxu0 0.0
        %835 = vmatprep.subr.mxu0 0.0
        %836 = vmatpush2.msra.mxu0 0.0
        %837 = vmatprep.subr.mxu0 0.0
        %838 = vmatpush2.msra.mxu0 0.0
        %839 = vmatprep.subr.mxu0 0.0
        %840 = vmatpush2.msra.mxu0 0.0
        %841 = vmatprep.subr.mxu0 0.0
        %842 = vmatpush2.msra.mxu0 0.0
        %843 = vmatprep.subr.mxu0 0.0
        %844 = vmatpush2.msra.mxu0 0.0
        %845 = vmatprep.subr.mxu0 0.0
        %846 = vmatpush2.msra.mxu0 0.0
        %847 = vmatprep.subr.mxu0 0.0
        %848 = vmatpush2.msra.mxu0 0.0
        %849 = vmatprep.subr.mxu0 0.0
        %850 = vmatpush2.msra.mxu0 0.0
        %851 = vmatprep.subr.mxu0 0.0
        %852 = vmatpush2.msra.mxu0 0.0
        %853 = vmatprep.subr.mxu0 0.0
        %854 = vmatpush2.msra.mxu0 0.0
        %855 = vmatprep.subr.mxu0 0.0
        %856 = vmatpush2.msra.mxu0 0.0
        %857 = vmatprep.subr.mxu0 0.0
        %858 = vmatpush2.msra.mxu0 0.0
        %859 = vmatprep.mubr.f32.mxu0 0.0
        %860 = vmatmul.mubr.f32.gmra.mxu0 %v793
        %v861 = vpop.f32.mrf.mxu0
        %v862 = vadd.f32 %v790, %v861
        %v863 = vpop.f32.mrf.mxu0
        %v864 = vadd.f32 %v790, %v863
        %865 = vdwg.mxu0
        %vm866 = vcmp.ge.f32.partialorder %v862, 0.0
        %vm867 = vcmp.ge.f32.partialorder %v864, 0.0
        %v868 = vstv %s320
        %v869 = vmul.f32 %v862, %v868
        %v870 = vmul.f32 %v864, %v868
        %v871 = vsel %vm866, %v862, %v869
        %v872 = vsel %vm867, %v864, %v870
        %v873 = vld [vmem:[%s260] sm:$0xff]
        %v876 = vcombine.low %v871, %v872
        %v878 = vadd.f32 %v873, %v876
        %879 = vst [vmem:[%s265] sm:$0xff] %v878
        %p880 = scmp.lt.s32.totalorder %s18, 1
        %s881 = scalar_select %p880, %s18, 1
        %s882 = smul.addr %s881, 2
        %s883 = smul.addr %s882, 4
        %s884 = scalar_lea.vmem %s6, %s883
        // Predicated region
        $region49: #{residual_block_nchw.1} parent=43 // pred_check
          %p885 = pneg %p167
        $region50: #{residual_block_nchw.1} parent=43 // pred_check_branch
          %887 = sbr.rel (%p885) target = $region52
        $region51: #{residual_block_nchw.1} parent=43 // pred_region
          _
        $region52: #{residual_block_nchw.1} parent=43 // pred_fallthru
          _
      $region44: #{residual_block_nchw.1} parent=5 // pred_fallthru
        _
      %p888 = scmp.le.s32.totalorder 2, %s13
      // Predicated region
      $region53: #{residual_block_nchw.1} parent=5 // pred_check
        %p889 = pneg %p888
      $region54: #{residual_block_nchw.1} parent=5 // pred_check_branch
        %891 = sbr.rel (%p889) target = $region56
      $region55: #{residual_block_nchw.1} parent=5 // pred_region
        %s892 = ssub.s32 %s13, 2
        // Predicated region
        $region57: #{residual_block_nchw.1} parent=55 // pred_check
          %p893 = pneg %p173
        $region58: #{residual_block_nchw.1} parent=55 // pred_check_branch
          %895 = sbr.rel (%p893) target = $region60
        $region59: #{residual_block_nchw.1} parent=55 // pred_region
          %p896 = scmp.lt.s32.totalorder %s19, 1
          %s897 = scalar_select %p896, %s19, 1
          %s898 = smul.addr %s897, 2
          %s899 = smul.addr %s898, 4
          %s900 = scalar_lea.vmem %s6, %s899
        $region60: #{residual_block_nchw.1} parent=55 // pred_fallthru
          _
      $region56: #{residual_block_nchw.1} parent=5 // pred_fallthru
        _
    $region6: #{residual_block_nchw.1} parent=1 // loop_footer
      %s17 = sadd.s32 1, %s13
    $region7: #{residual_block_nchw.1} parent=1 // loop_footer_branch
      %12 = sbr.rel target = $region3
    $region8: #{residual_block_nchw.1} parent=1 // loop_exit
      _
    %901 = vsyncpa [#allocation5], 1
    %s902 = scalar_lea.sflag [#allocation5], 1
    %903 = vsyncpa %s902, 1

</llo_original>
